<compile_context>
chip_gen: v5e
topology: v5e:2x2
jax: 0.10.0
libtpu: 0.0.40
codegen_flags: <defaults>
</compile_context>

<pallas_src>
import math
from functools import partial

import jax
import jax.numpy as jnp
from jax import lax
from jax.experimental import pallas as pl
from jax.experimental.pallas import tpu as pltpu


def _round_up(v, m):
    return -(-v // m) * m


_TILE_CANDIDATES = (4096, 2048, 1024, 512, 256, 128, 64, 32, 16, 8)


def _vmem_capacity_bytes():
    """Per-core physical VMEM (generation-aware) with a conservative fallback."""
    try:
        return int(pltpu.get_tpu_info().vmem_capacity_bytes)
    except Exception:
        # v7x per-TC size; safe lower bound across v5e/v6e/v7x.
        return 64 << 20


def _choose_tile_n(N, C_in, H, C_out, h_chunk, x_itemsize, w_itemsize,
                   out_itemsize, budget):
    """Largest N-tile whose VMEM working set fits `budget` bytes."""
    # Weights/biases counted double-buffered: conservative upper bound — the
    # constant-index blocks are only fetched once, but the pipeline may still
    # allocate two buffers.  Over-counting only shrinks tile_n; never OOMs.
    weight_bytes = 2 * ((C_in * H + H * C_out) * w_itemsize + (H + C_out) * 4)
    h_eff = min(H, h_chunk)
    # Per-row bytes: x tile (double-buffered) + out tile (double-buffered)
    # + f32 output accumulator + ~3x f32 live hidden-chunk values (h + gelu tmp).
    per_row = (2 * C_in * x_itemsize + 2 * C_out * out_itemsize
               + 4 * C_out + 3 * 4 * h_eff)
    n_aligned = _round_up(max(N, 1), 8)
    for cand in _TILE_CANDIDATES:
        tile = min(cand, n_aligned)
        if weight_bytes + tile * per_row <= budget:
            return tile
    return min(_TILE_CANDIDATES[-1], n_aligned)


def _mlp_kernel(x_ref, w1_ref, b1_ref, w2_ref, b2_ref, o_ref, *,
                h_chunk, approximate_gelu, compute_dtype):
    # x_ref:  (tile_n, C_in)   VMEM
    # w1_ref: (C_in, H)        VMEM (resident)
    # b1_ref: (1, H)           VMEM (f32)
    # w2_ref: (H, C_out)       VMEM (resident)
    # b2_ref: (1, C_out)       VMEM (f32)
    # o_ref:  (tile_n, C_out)  VMEM
    x = x_ref[...]
    if compute_dtype is not None and x.dtype != jnp.dtype(compute_dtype):
        # Per-tile cast on the VPU (hidden under the MXU); avoids a separate
        # wrapper-side HBM pass over x.
        x = x.astype(compute_dtype)

    H = w1_ref.shape[1]
    acc = jnp.zeros((x_ref.shape[0], o_ref.shape[1]), jnp.float32)
    inv_sqrt2 = jnp.float32(1.0 / math.sqrt(2.0))

    # Chunk the hidden dim: never materialize the full (tile_n, H) f32
    # intermediate.  Weights are VMEM-resident, so static slicing is cheap,
    # and the loop bounds are static -> fully unrolled at trace time.
    for c0 in range(0, H, h_chunk):
        hk = min(h_chunk, H - c0)
        h = jnp.dot(x, w1_ref[:, c0:c0 + hk],
                    preferred_element_type=jnp.float32)
        h = h + b1_ref[:, c0:c0 + hk]
        if approximate_gelu:
            # tanh approximation -> transcendental lands on the EUP slot.
            h = jax.nn.gelu(h, approximate=True)
        else:
            # exact GELU (matches torch.nn.GELU() default): 0.5*x*(1+erf(x/sqrt(2)))
            h = 0.5 * h * (1.0 + lax.erf(h * inv_sqrt2))
        # dropout p=0.0 -> identity
        w2c = w2_ref[c0:c0 + hk, :]
        acc = acc + jnp.dot(h.astype(w2c.dtype), w2c,
                            preferred_element_type=jnp.float32)

    # dropout p=0.0 -> identity
    o_ref[...] = (acc + b2_ref[...]).astype(o_ref.dtype)


def mlp_pallas(x, w1, b1, w2, b2, *, tile_n=None, h_chunk=512,
               compute_dtype=None, approximate_gelu=False, out_dtype=None):
    """x: (..., C_in); w1: (C_in, H); b1: (H,); w2: (H, C_out); b2: (C_out,)."""
    orig_shape = x.shape
    C_in = orig_shape[-1]
    H = w1.shape[1]
    C_out = w2.shape[1]
    out_dtype = out_dtype or x.dtype

    x2d = x.reshape(-1, C_in)
    N = x2d.shape[0]

    # Optional low-precision matmul operands (recommended on v6e/v7x): weights
    # are cast once here (small, one-time); the x tile is cast inside the
    # kernel.  Bias add, GELU and accumulation remain f32.
    w_dtype = compute_dtype if compute_dtype is not None else w1.dtype
    w1 = w1.astype(w_dtype)
    w2 = w2.astype(w_dtype)
    b1_f32 = b1.astype(jnp.float32)
    b2_2d = b2.astype(jnp.float32).reshape(1, C_out)

    # Pad the hidden dim once (weights only) to a 128 multiple so the hidden
    # intermediate is lane-dense / MXU-friendly.  gelu(0) == 0, so the padded
    # columns/rows contribute exactly zero to the output.
    if H % 128 != 0:
        H_pad = _round_up(H, 128)
        w1 = jnp.pad(w1, ((0, 0), (0, H_pad - H)))
        b1_f32 = jnp.pad(b1_f32, (0, H_pad - H))
        w2 = jnp.pad(w2, ((0, H_pad - H), (0, 0)))
        H = H_pad
    b1_2d = b1_f32.reshape(1, H)

    h_chunk = max(128, min(_round_up(h_chunk, 128), H))

    x_is = jnp.dtype(x2d.dtype).itemsize
    w_is = jnp.dtype(w_dtype).itemsize
    out_is = jnp.dtype(out_dtype).itemsize

    vmem_cap = _vmem_capacity_bytes()
    budget = (vmem_cap * 3) // 4            # leave headroom for compiler scratch

    # Sublane packing of the narrower operand dtype (bf16 packs 16 rows/vreg).
    sublane = 16 if (w_is <= 2 or x_is <= 2) else 8

    if tile_n is None:
        tile_n = _choose_tile_n(N, C_in, H, C_out, h_chunk,
                                x_is, w_is, out_is, budget)
    # Keep >= 4 grid steps so both v7x TensorCores get work over the "parallel"
    # axis (and the pipeline has something to overlap); negligible cost on 1-TC
    # chips.
    tile_n = min(tile_n, _round_up(pl.cdiv(N, 4), sublane))
    tile_n = _round_up(max(sublane, tile_n), sublane)

    # No wrapper-side pad/slice over N: Pallas masks the partial last block.
    grid = (pl.cdiv(N, tile_n),)

    weight_bytes = 2 * ((C_in * H + H * C_out) * w_is + (H + C_out) * 4)
    tile_bytes = tile_n * (2 * C_in * x_is + 2 * C_out * out_is
                           + 4 * C_out + 3 * 4 * min(H, h_chunk))
    vmem_limit = int(min(max(weight_bytes + tile_bytes + (8 << 20), 32 << 20),
                         (vmem_cap * 15) // 16, 128 << 20))

    cost = pl.CostEstimate(
        flops=2 * N * (C_in * H + H * C_out),
        transcendentals=(N * H if approximate_gelu else 0),
        bytes_accessed=(N * C_in * x_is
                        + (C_in * H + H * C_out) * w_is + (H + C_out) * 4
                        + N * C_out * out_is),
    )

    kernel = partial(_mlp_kernel, h_chunk=h_chunk,
                     approximate_gelu=approximate_gelu,
                     compute_dtype=compute_dtype)

    out = pl.pallas_call(
        kernel,
        out_shape=jax.ShapeDtypeStruct((N, C_out), out_dtype),
        grid_spec=pltpu.PrefetchScalarGridSpec(
            num_scalar_prefetch=0,
            grid=grid,
            in_specs=[
                pl.BlockSpec((tile_n, C_in), lambda i: (i, 0)),   # x tile
                pl.BlockSpec((C_in, H), lambda i: (0, 0)),        # w1 (resident)
                pl.BlockSpec((1, H), lambda i: (0, 0)),           # b1 (f32)
                pl.BlockSpec((H, C_out), lambda i: (0, 0)),       # w2 (resident)
                pl.BlockSpec((1, C_out), lambda i: (0, 0)),       # b2 (f32)
            ],
            out_specs=pl.BlockSpec((tile_n, C_out), lambda i: (i, 0)),
        ),
        compiler_params=pltpu.CompilerParams(
            dimension_semantics=("parallel",),
            vmem_limit_bytes=vmem_limit,
        ),
        cost_estimate=cost,
    )(x2d, w1, b1_2d, w2, b2_2d)

    return out.reshape(orig_shape[:-1] + (C_out,))


def mlp_reference(x, w1, b1, w2, b2):
    h = x @ w1 + b1
    h = 0.5 * h * (1.0 + lax.erf(h / jnp.sqrt(2.0).astype(h.dtype)))
    return h @ w2 + b2


if __name__ == "__main__":
    key = jax.random.PRNGKey(0)
    k_x, k_w1, k_b1, k_w2, k_b2 = jax.random.split(key, 5)

    # Small shapes consistent with the module: (batch, tokens, channels).
    B, T, C_in, Hid, C_out = 2, 128, 32, 64, 32
    dtype = jnp.float32

    x = jax.random.normal(k_x, (B, T, C_in), dtype=dtype)

    # Deterministic "Kaiming-uniform-ish" init, shapes from nn.Linear.__init__
    # (stored transposed: (in, out) instead of PyTorch's (out, in)).
    lim1 = 1.0 / math.sqrt(C_in)
    lim2 = 1.0 / math.sqrt(Hid)
    w1 = jax.random.uniform(k_w1, (C_in, Hid), dtype, -lim1, lim1)
    b1 = jax.random.uniform(k_b1, (Hid,), dtype, -lim1, lim1)
    w2 = jax.random.uniform(k_w2, (Hid, C_out), dtype, -lim2, lim2)
    b2 = jax.random.uniform(k_b2, (C_out,), dtype, -lim2, lim2)

    ref = mlp_reference(x, w1, b1, w2, b2)

    # f32 path (exact erf GELU) — must match the PyTorch-equivalent reference.
    out = jax.block_until_ready(mlp_pallas(x, w1, b1, w2, b2))
    assert out.shape == (B, T, C_out)
    assert jnp.allclose(out, ref, atol=1e-5, rtol=1e-5), "f32 mismatch vs reference"

    # bf16 matmul-operand path (v6e/v7x MXU optimization); looser tolerance
    # because operands are rounded to bf16 (accumulation stays f32).
    out_bf16 = jax.block_until_ready(
        mlp_pallas(x, w1, b1, w2, b2, compute_dtype=jnp.bfloat16))
    assert out_bf16.shape == (B, T, C_out)
    assert jnp.allclose(out_bf16.astype(jnp.float32), ref, atol=1e-1, rtol=1e-1), \
        "bf16 mismatch vs reference"

    print("KERNEL_OK")
</pallas_src>

<mosaic_0001>
module attributes {stable_mosaic.version = 11 : i64} {
  func.func @_mlp_kernel(%arg0: i32, %arg1: memref<64x32xf32, #tpu.memory_space<vmem>>, %arg2: memref<32x128xf32, #tpu.memory_space<vmem>>, %arg3: memref<1x128xf32, #tpu.memory_space<vmem>>, %arg4: memref<128x32xf32, #tpu.memory_space<vmem>>, %arg5: memref<1x32xf32, #tpu.memory_space<vmem>>, %arg6: memref<64x32xf32, #tpu.memory_space<vmem>>) attributes {dimension_semantics = [#tpu.dimension_semantics<parallel>], iteration_bounds = array<i64: 4>, scalar_prefetch = 0 : i64, scratch_operands = 0 : i64, tpu.core_type = #tpu.core_type<tc>, window_params = [{transform_indices = @transform_0, window_bounds = array<i64: 64, 32>}, {pipeline_mode = #tpu.pipeline_mode<synchronous>, transform_indices = @transform_1, window_bounds = array<i64: 32, 128>}, {pipeline_mode = #tpu.pipeline_mode<synchronous>, transform_indices = @transform_2, window_bounds = array<i64: 1, 128>}, {pipeline_mode = #tpu.pipeline_mode<synchronous>, transform_indices = @transform_3, window_bounds = array<i64: 128, 32>}, {pipeline_mode = #tpu.pipeline_mode<synchronous>, transform_indices = @transform_4, window_bounds = array<i64: 1, 32>}, {transform_indices = @transform_5, window_bounds = array<i64: 64, 32>}]} {
    %c0 = arith.constant 0 : index
    %c0_0 = arith.constant 0 : index
    %0 = vector.load %arg1[%c0, %c0_0] : memref<64x32xf32, #tpu.memory_space<vmem>>, vector<64x32xf32>
    %cst = arith.constant 0.000000e+00 : f32
    %1 = vector.broadcast %cst : f32 to vector<64x32xf32>
    %c0_1 = arith.constant 0 : index
    %c0_2 = arith.constant 0 : index
    %2 = vector.load %arg2[%c0_1, %c0_2] : memref<32x128xf32, #tpu.memory_space<vmem>>, vector<32x128xf32>
    %cst_3 = arith.constant dense<0.000000e+00> : vector<64x128xf32>
    %3 = tpu.matmul %0, %2, %cst_3 {dimension_numbers = #tpu.dot_dimension_numbers<[1], [0], [0], [1], [0, 0, 1, 1], [], []>} : vector<64x32xf32>, vector<32x128xf32>, vector<64x128xf32> -> vector<64x128xf32>
    %c0_4 = arith.constant 0 : index
    %c0_5 = arith.constant 0 : index
    %4 = vector.load %arg3[%c0_4, %c0_5] : memref<1x128xf32, #tpu.memory_space<vmem>>, vector<1x128xf32>
    %5 = vector.broadcast %4 : vector<1x128xf32> to vector<64x128xf32>
    %6 = arith.addf %3, %5 : vector<64x128xf32>
    %cst_6 = arith.constant 5.000000e-01 : f32
    %7 = vector.broadcast %cst_6 : f32 to vector<64x128xf32>
    %8 = arith.mulf %7, %6 : vector<64x128xf32>
    %cst_7 = arith.constant 0.707106769 : f32
    %9 = vector.broadcast %cst_7 : f32 to vector<64x128xf32>
    %10 = arith.mulf %6, %9 : vector<64x128xf32>
    %11 = math.erf %10 : vector<64x128xf32>
    %cst_8 = arith.constant 1.000000e+00 : f32
    %12 = vector.broadcast %cst_8 : f32 to vector<64x128xf32>
    %13 = arith.addf %12, %11 : vector<64x128xf32>
    %14 = arith.mulf %8, %13 : vector<64x128xf32>
    %c0_9 = arith.constant 0 : index
    %c0_10 = arith.constant 0 : index
    %15 = vector.load %arg4[%c0_9, %c0_10] : memref<128x32xf32, #tpu.memory_space<vmem>>, vector<128x32xf32>
    %cst_11 = arith.constant dense<0.000000e+00> : vector<64x32xf32>
    %16 = tpu.matmul %14, %15, %cst_11 {dimension_numbers = #tpu.dot_dimension_numbers<[1], [0], [0], [1], [0, 0, 1, 1], [], []>} : vector<64x128xf32>, vector<128x32xf32>, vector<64x32xf32> -> vector<64x32xf32>
    %17 = arith.addf %1, %16 : vector<64x32xf32>
    %c0_12 = arith.constant 0 : index
    %c0_13 = arith.constant 0 : index
    %18 = vector.load %arg5[%c0_12, %c0_13] : memref<1x32xf32, #tpu.memory_space<vmem>>, vector<1x32xf32>
    %19 = vector.broadcast %18 : vector<1x32xf32> to vector<64x32xf32>
    %20 = arith.addf %17, %19 : vector<64x32xf32>
    %c0_14 = arith.constant 0 : index
    %c0_15 = arith.constant 0 : index
    %21 = vector.load %arg6[%c0_14, %c0_15] : memref<64x32xf32, #tpu.memory_space<vmem>>, vector<64x32xf32>
    tpu.vector_store %arg6[%c0_14, %c0_15], %20 {strides = array<i32>} : memref<64x32xf32, #tpu.memory_space<vmem>>, vector<64x32xf32>,
    return
  }
  func.func @transform_0(%arg0: i32) -> (i32, i32) {
    %c0_i32 = arith.constant 0 : i32
    %c0_i32_0 = arith.constant 0 : i32
    return %arg0, %c0_i32 : i32, i32
  }
  func.func @transform_1(%arg0: i32) -> (i32, i32) {
    %c0_i32 = arith.constant 0 : i32
    %c0_i32_0 = arith.constant 0 : i32
    %c0_i32_1 = arith.constant 0 : i32
    return %c0_i32, %c0_i32_0 : i32, i32
  }
  func.func @transform_2(%arg0: i32) -> (i32, i32) {
    %c0_i32 = arith.constant 0 : i32
    %c0_i32_0 = arith.constant 0 : i32
    %c0_i32_1 = arith.constant 0 : i32
    return %c0_i32, %c0_i32_0 : i32, i32
  }
  func.func @transform_3(%arg0: i32) -> (i32, i32) {
    %c0_i32 = arith.constant 0 : i32
    %c0_i32_0 = arith.constant 0 : i32
    %c0_i32_1 = arith.constant 0 : i32
    return %c0_i32, %c0_i32_0 : i32, i32
  }
  func.func @transform_4(%arg0: i32) -> (i32, i32) {
    %c0_i32 = arith.constant 0 : i32
    %c0_i32_0 = arith.constant 0 : i32
    %c0_i32_1 = arith.constant 0 : i32
    return %c0_i32, %c0_i32_0 : i32, i32
  }
  func.func @transform_5(%arg0: i32) -> (i32, i32) {
    %c0_i32 = arith.constant 0 : i32
    %c0_i32_0 = arith.constant 0 : i32
    return %arg0, %c0_i32 : i32, i32
  }
}

</mosaic_0001>

<llo_original>
// kernel: tpu_custom_call.1
$region0: #{tpu_custom_call.1}
  #allocation0 [shape = 'u32[]', space=smem, size = 0x4, offset = 0x4, fixed_abs, tag = 'smem constant byte address 0x4 - core index']
  #allocation1 [shape = 'u32[72,128]{1,0:T(1,128)}', space=vmem, size = 0x9000, scoped, tag = 'internal scratch']
  %s0 = inlined_call_operand.vmem [shape: f32[256,32], index: 0, kind: input, shape index: {}]
  %s1 = inlined_call_operand.vmem [shape: f32[32,128], index: 1, kind: input, shape index: {}]
  %s2 = inlined_call_operand.vmem [shape: f32[1,128], index: 2, kind: input, shape index: {}]
  %s3 = inlined_call_operand.vmem [shape: f32[128,32], index: 3, kind: input, shape index: {}]
  %s4 = inlined_call_operand.vmem [shape: f32[1,32], index: 4, kind: input, shape index: {}]
  %s5 = inlined_call_operand.vmem [shape: f32[256,32], index: 5, kind: output, shape index: {}]
  %s6 = sld [smem:[#allocation0]]
  $region53: #{tpu_custom_call.1} parent=0
    _
  %s8 = ssub.s32 1, %s6
  %s9 = scalar_select 0, %s8, %s6
  loop: start=0, step=1, limit=6
  $region2: #{tpu_custom_call.1} parent=0 // loop_pre_header
    _
  $region3: #{tpu_custom_call.1} parent=0 // loop_header
    %s11 = sphi 0, %s15
    %p12 = scmp.ge.s32.totalorder %s11, 6
    %s21 = sphi 0, %s23
    %s24 = sphi 0, %s21
    %s25 = sphi 0, %s24
    %s41 = sphi 0, %s25
    %s45 = sphi 0, %s45
    %s47 = sphi 0, %s45
    %s48 = sphi 0, %s47
    %s62 = sphi 0, %s48
    %s66 = sphi 0, %s66
    %s68 = sphi 0, %s66
    %s69 = sphi 0, %s68
    %s83 = sphi 0, %s69
    %s87 = sphi 0, %s87
    %s89 = sphi 0, %s87
    %s90 = sphi 0, %s89
    %s104 = sphi 0, %s90
    %s108 = sphi 0, %s108
    %s110 = sphi 0, %s108
    %s111 = sphi 0, %s110
    %s125 = sphi 0, %s111
    %s131 = sphi 0, %s133
    %s134 = sphi 0, %s131
    %s135 = sphi 0, %s134
    %s151 = sphi 0, %s135
  $region4: #{tpu_custom_call.1} parent=0 // loop_header_branch
    %14 = sbr.rel (%p12) target = $region8
  $region5: #{tpu_custom_call.1} parent=0 // loop_body
    %s16 = ssub.s32 %s11, 1
    %s17 = ssub.s32 %s11, 2
    %s18 = sadd.s32 %s11, 1
    %s19 = ssub.s32 %s11, %s18
    %p20 = scmp.eq.s32.totalorder %s19, 0
    %s22 = sadd.s32 %s21, 1
    %s23 = scalar_select %p20, %s21, %s22
    %p26 = pneg %p20
    %p27 = scmp.eq.s32.totalorder %s11, 3
    %p28 = por %p26, %p27
    %p29 = scmp.ne.s32.totalorder %s21, %s24
    %p30 = scmp.eq.s32.totalorder %s11, 0
    %p31 = por %p29, %p30
    %p32 = scmp.ne.s32.totalorder %s21, %s24
    %p33 = scmp.eq.s32.totalorder %s16, 3
    %p34 = por %p32, %p33
    %p35 = scmp.ne.s32.totalorder %s24, %s25
    %p36 = scmp.eq.s32.totalorder %s16, 0
    %p37 = por %p35, %p36
    %p38 = scmp.ne.s32.totalorder %s24, %s25
    %p39 = scmp.eq.s32.totalorder %s17, 3
    %p40 = por %p38, %p39
    %p42 = scmp.ne.s32.totalorder %s25, %s41
    %p43 = scmp.eq.s32.totalorder %s17, 0
    %p44 = por %p42, %p43
    %s46 = sadd.s32 %s45, 1
    %p49 = scmp.eq.s32.totalorder %s11, 3
    %p50 = scmp.ne.s32.totalorder %s45, %s47
    %p51 = scmp.eq.s32.totalorder %s11, 0
    %p52 = por %p50, %p51
    %p53 = scmp.ne.s32.totalorder %s45, %s47
    %p54 = scmp.eq.s32.totalorder %s16, 3
    %p55 = por %p53, %p54
    %p56 = scmp.ne.s32.totalorder %s47, %s48
    %p57 = scmp.eq.s32.totalorder %s16, 0
    %p58 = por %p56, %p57
    %p59 = scmp.ne.s32.totalorder %s47, %s48
    %p60 = scmp.eq.s32.totalorder %s17, 3
    %p61 = por %p59, %p60
    %p63 = scmp.ne.s32.totalorder %s48, %s62
    %p64 = scmp.eq.s32.totalorder %s17, 0
    %p65 = por %p63, %p64
    %s67 = sadd.s32 %s66, 1
    %p70 = scmp.eq.s32.totalorder %s11, 3
    %p71 = scmp.ne.s32.totalorder %s66, %s68
    %p72 = scmp.eq.s32.totalorder %s11, 0
    %p73 = por %p71, %p72
    %p74 = scmp.ne.s32.totalorder %s66, %s68
    %p75 = scmp.eq.s32.totalorder %s16, 3
    %p76 = por %p74, %p75
    %p77 = scmp.ne.s32.totalorder %s68, %s69
    %p78 = scmp.eq.s32.totalorder %s16, 0
    %p79 = por %p77, %p78
    %p80 = scmp.ne.s32.totalorder %s68, %s69
    %p81 = scmp.eq.s32.totalorder %s17, 3
    %p82 = por %p80, %p81
    %p84 = scmp.ne.s32.totalorder %s69, %s83
    %p85 = scmp.eq.s32.totalorder %s17, 0
    %p86 = por %p84, %p85
    %s88 = sadd.s32 %s87, 1
    %p91 = scmp.eq.s32.totalorder %s11, 3
    %p92 = scmp.ne.s32.totalorder %s87, %s89
    %p93 = scmp.eq.s32.totalorder %s11, 0
    %p94 = por %p92, %p93
    %p95 = scmp.ne.s32.totalorder %s87, %s89
    %p96 = scmp.eq.s32.totalorder %s16, 3
    %p97 = por %p95, %p96
    %p98 = scmp.ne.s32.totalorder %s89, %s90
    %p99 = scmp.eq.s32.totalorder %s16, 0
    %p100 = por %p98, %p99
    %p101 = scmp.ne.s32.totalorder %s89, %s90
    %p102 = scmp.eq.s32.totalorder %s17, 3
    %p103 = por %p101, %p102
    %p105 = scmp.ne.s32.totalorder %s90, %s104
    %p106 = scmp.eq.s32.totalorder %s17, 0
    %p107 = por %p105, %p106
    %s109 = sadd.s32 %s108, 1
    %p112 = scmp.eq.s32.totalorder %s11, 3
    %p113 = scmp.ne.s32.totalorder %s108, %s110
    %p114 = scmp.eq.s32.totalorder %s11, 0
    %p115 = por %p113, %p114
    %p116 = scmp.ne.s32.totalorder %s108, %s110
    %p117 = scmp.eq.s32.totalorder %s16, 3
    %p118 = por %p116, %p117
    %p119 = scmp.ne.s32.totalorder %s110, %s111
    %p120 = scmp.eq.s32.totalorder %s16, 0
    %p121 = por %p119, %p120
    %p122 = scmp.ne.s32.totalorder %s110, %s111
    %p123 = scmp.eq.s32.totalorder %s17, 3
    %p124 = por %p122, %p123
    %p126 = scmp.ne.s32.totalorder %s111, %s125
    %p127 = scmp.eq.s32.totalorder %s17, 0
    %p128 = por %p126, %p127
    %s129 = ssub.s32 %s11, %s18
    %p130 = scmp.eq.s32.totalorder %s129, 0
    %s132 = sadd.s32 %s131, 1
    %s133 = scalar_select %p130, %s131, %s132
    %p136 = pneg %p130
    %p137 = scmp.eq.s32.totalorder %s11, 3
    %p138 = por %p136, %p137
    %p139 = scmp.ne.s32.totalorder %s131, %s134
    %p140 = scmp.eq.s32.totalorder %s11, 0
    %p141 = por %p139, %p140
    %p142 = scmp.ne.s32.totalorder %s131, %s134
    %p143 = scmp.eq.s32.totalorder %s16, 3
    %p144 = por %p142, %p143
    %p145 = scmp.ne.s32.totalorder %s134, %s135
    %p146 = scmp.eq.s32.totalorder %s16, 0
    %p147 = por %p145, %p146
    %p148 = scmp.ne.s32.totalorder %s134, %s135
    %p149 = scmp.eq.s32.totalorder %s17, 3
    %p150 = por %p148, %p149
    %p152 = scmp.ne.s32.totalorder %s135, %s151
    %p153 = scmp.eq.s32.totalorder %s17, 0
    %p154 = por %p152, %p153
    %p155 = scmp.le.s32.totalorder 1, %s11
    %p156 = scmp.lt.s32.totalorder %s11, 5
    %p157 = pnand %p155, %p156
    %p158 = pneg %p157
    // Predicated region
    $region9: #{tpu_custom_call.1} parent=5 // pred_check
      _
    $region10: #{tpu_custom_call.1} parent=5 // pred_check_branch
      %160 = sbr.rel (%p157) target = $region12
    $region11: #{tpu_custom_call.1} parent=5 // pred_region
      %s161 = ssub.s32 %s11, 1
      // Predicated region
      $region13: #{tpu_custom_call.1} parent=11 // pred_check
        %p162 = pneg %p58
      $region14: #{tpu_custom_call.1} parent=11 // pred_check_branch
        %164 = sbr.rel (%p162) target = $region16
      $region15: #{tpu_custom_call.1} parent=11 // pred_region
        _
      $region16: #{tpu_custom_call.1} parent=11 // pred_fallthru
        _
      // Predicated region
      $region17: #{tpu_custom_call.1} parent=11 // pred_check
        %p165 = pneg %p79
      $region18: #{tpu_custom_call.1} parent=11 // pred_check_branch
        %167 = sbr.rel (%p165) target = $region20
      $region19: #{tpu_custom_call.1} parent=11 // pred_region
        _
      $region20: #{tpu_custom_call.1} parent=11 // pred_fallthru
        _
      // Predicated region
      $region21: #{tpu_custom_call.1} parent=11 // pred_check
        %p168 = pneg %p100
      $region22: #{tpu_custom_call.1} parent=11 // pred_check_branch
        %170 = sbr.rel (%p168) target = $region24
      $region23: #{tpu_custom_call.1} parent=11 // pred_region
        _
      $region24: #{tpu_custom_call.1} parent=11 // pred_fallthru
        _
      // Predicated region
      $region25: #{tpu_custom_call.1} parent=11 // pred_check
        %p171 = pneg %p121
      $region26: #{tpu_custom_call.1} parent=11 // pred_check_branch
        %173 = sbr.rel (%p171) target = $region28
      $region27: #{tpu_custom_call.1} parent=11 // pred_region
        _
      $region28: #{tpu_custom_call.1} parent=11 // pred_fallthru
        _
    $region12: #{tpu_custom_call.1} parent=5 // pred_fallthru
      _
    %p174 = scmp.lt.s32.totalorder %s11, 4
    // Predicated region
    $region29: #{tpu_custom_call.1} parent=5 // pred_check
      %p175 = pneg %p174
    $region30: #{tpu_custom_call.1} parent=5 // pred_check_branch
      %177 = sbr.rel (%p175) target = $region32
    $region31: #{tpu_custom_call.1} parent=5 // pred_region
      // Predicated region
      $region33: #{tpu_custom_call.1} parent=31 // pred_check
        %p178 = pneg %p31
      $region34: #{tpu_custom_call.1} parent=31 // pred_check_branch
        %180 = sbr.rel (%p178) target = $region36
      $region35: #{tpu_custom_call.1} parent=31 // pred_region
        %s181 = smul.u32 8, %s11
        %p182 = scmp.lt.s32.totalorder %s181, 31
        %s183 = scalar_select %p182, %s181, 31
        %s184 = smul.addr %s183, 8
        %s185 = scalar_lea.vmem %s0, %s184
        %s186 = smul.u32 8, %s11
      $region36: #{tpu_custom_call.1} parent=31 // pred_fallthru
        _
    $region32: #{tpu_custom_call.1} parent=5 // pred_fallthru
      _
    %p187 = scmp.le.s32.totalorder 1, %s11
    %p188 = scmp.lt.s32.totalorder %s11, 5
    %p189 = pnand %p187, %p188
    %p190 = pneg %p189
    // Predicated region
    $region37: #{tpu_custom_call.1} parent=5 // pred_check
      _
    $region38: #{tpu_custom_call.1} parent=5 // pred_check_branch
      %192 = sbr.rel (%p189) target = $region40
    $region39: #{tpu_custom_call.1} parent=5 // pred_region
      %s193 = ssub.s32 %s11, 1
      %s194 = smul.u32 8, %s16
      %p195 = scmp.lt.s32.totalorder %s194, 31
      %s196 = scalar_select %p195, %s194, 31
      %s197 = smul.addr %s196, 8
      %s198 = scalar_lea.vmem %s0, %s197
      %p199 = pneg %p37
      %p200 = pneg %p34
      %p201 = pneg %p58
      %p202 = pneg %p55
      %p203 = pneg %p79
      %p204 = pneg %p76
      %p205 = pneg %p100
      %p206 = pneg %p97
      %p207 = pneg %p121
      %p208 = pneg %p118
      %p209 = pneg %p147
      %p210 = pneg %p144
      %s211 = smul.u32 8, %s16
      %p212 = scmp.lt.s32.totalorder %s211, 31
      %s213 = scalar_select %p212, %s211, 31
      %s214 = smul.addr %s213, 8
      %s215 = scalar_lea.vmem %s5, %s214
      %s216 = smul.u32 8, %s16
      %p217 = scmp.lt.s32.totalorder %s216, 31
      %s218 = scalar_select %p217, %s216, 31
      %s219 = smul.addr %s218, 8
      %s220 = scalar_lea.vmem %s0, %s219
      %s221 = smul.u32 8, %s16
      %s222 = smul.u32 8, %s16
      %p223 = scmp.lt.s32.totalorder %s222, 31
      %s224 = scalar_select %p223, %s222, 31
      %s225 = smul.addr %s224, 8
      %s226 = scalar_lea.vmem %s5, %s225
      %s227 = smul.u32 8, %s16
      %v228 = vld [vmem:[%s220] sm:$0xff]
      %v229 = vld [vmem:[%s220 + $0x8] sm:$0xff]
      %v230 = vld [vmem:[%s220 + $0x10] sm:$0xff]
      %v231 = vld [vmem:[%s220 + $0x18] sm:$0xff]
      %v232 = vld [vmem:[%s220 + $0x20] sm:$0xff]
      %v233 = vld [vmem:[%s220 + $0x28] sm:$0xff]
      %v234 = vld [vmem:[%s220 + $0x30] sm:$0xff]
      %v235 = vld [vmem:[%s220 + $0x38] sm:$0xff]
      %v236 = vld [vmem:[%s1] sm:$0xff]
      %v237 = vld [vmem:[%s1 + $0x8] sm:$0xff]
      %v238 = vld [vmem:[%s1 + $0x10] sm:$0xff]
      %v239 = vld [vmem:[%s1 + $0x18] sm:$0xff]
      %v240 = vld [vmem:[%s2] sm:$0x1]
      %v242 = vperm.slane %v240, 0
      %vm244 = vcmask 261120
      %v246 = vsel %vm244, %v228, 0
      %v249 = vsel %vm244, %v229, 0
      %v252 = vsel %vm244, %v230, 0
      %v255 = vsel %vm244, %v231, 0
      %v258 = vsel %vm244, %v232, 0
      %v261 = vsel %vm244, %v233, 0
      %v264 = vsel %vm244, %v234, 0
      %v267 = vsel %vm244, %v235, 0
      %269 = vmatpush.msra.mxu0 0.0
      %270 = vmatpush.msra.mxu0 0.0
      %271 = vmatpush.msra.mxu0 0.0
      %272 = vmatpush.msra.mxu0 0.0
      %273 = vmatpush.msra.mxu0 0.0
      %274 = vmatpush.msra.mxu0 0.0
      %275 = vmatpush.msra.mxu0 0.0
      %276 = vmatpush.msra.mxu0 0.0
      %277 = vmatpush.msra.mxu0 0.0
      %278 = vmatpush.msra.mxu0 0.0
      %279 = vmatpush.msra.mxu0 0.0
      %280 = vmatpush.msra.mxu0 0.0
      %281 = vmatpush.msra.mxu0 %v239
      %282 = vmatpush.msra.mxu0 %v238
      %283 = vmatpush.msra.mxu0 %v237
      %284 = vmatpush.msra.mxu0 %v236
      %285 = vmatmul.f32.gmra.mxu0 %v246
      %v286 = vpop.f32.mrf.mxu0
      %v287 = vadd.f32 %v242, %v286
      %288 = vmatmul.f32.gmra.mxu0 %v249
      %v289 = vpop.f32.mrf.mxu0
      %v290 = vadd.f32 %v242, %v289
      %291 = vmatmul.f32.gmra.mxu0 %v252
      %v292 = vpop.f32.mrf.mxu0
      %v293 = vadd.f32 %v242, %v292
      %294 = vmatmul.f32.gmra.mxu0 %v255
      %v295 = vpop.f32.mrf.mxu0
      %v296 = vadd.f32 %v242, %v295
      %297 = vmatmul.f32.gmra.mxu0 %v258
      %v298 = vpop.f32.mrf.mxu0
      %v299 = vadd.f32 %v242, %v298
      %300 = vmatmul.f32.gmra.mxu0 %v261
      %v301 = vpop.f32.mrf.mxu0
      %v302 = vadd.f32 %v242, %v301
      %303 = vmatmul.f32.gmra.mxu0 %v264
      %v304 = vpop.f32.mrf.mxu0
      %v305 = vadd.f32 %v242, %v304
      %306 = vmatmul.f32.gmra.mxu0 %v267
      %v307 = vpop.f32.mrf.mxu0
      %v308 = vadd.f32 %v242, %v307
      %309 = vdwg.mxu0
      %v310 = vmul.f32 %v287, 0.5
      %v311 = vmul.f32 %v290, 0.5
      %v312 = vmul.f32 %v293, 0.5
      %v313 = vmul.f32 %v296, 0.5
      %v314 = vmul.f32 %v299, 0.5
      %v315 = vmul.f32 %v302, 0.5
      %v316 = vmul.f32 %v305, 0.5
      %v317 = vmul.f32 %v308, 0.5
      %v318 = vmul.f32 %v287, 0.70710677
      %v319 = vmul.f32 %v290, 0.70710677
      %v320 = vmul.f32 %v293, 0.70710677
      %v321 = vmul.f32 %v296, 0.70710677
      %v322 = vmul.f32 %v299, 0.70710677
      %v323 = vmul.f32 %v302, 0.70710677
      %v324 = vmul.f32 %v305, 0.70710677
      %v325 = vmul.f32 %v308, 0.70710677
      %v326 = vmul.f32 %v318, %v318
      %v327 = vmin.f32 16.0, %v326
      %v328 = vmul.f32 %v327, 2.1237322e-06
      %v329 = vadd.f32 %v328, 0.00028619796
      %v330 = vmul.f32 %v327, %v329
      %v331 = vadd.f32 %v330, 0.0036580483
      %v332 = vmul.f32 %v327, %v331
      %v333 = vadd.f32 %v332, 0.05243302
      %v334 = vmul.f32 %v327, %v333
      %v335 = vadd.f32 %v334, 0.18741608
      %v336 = vmul.f32 %v327, %v335
      %v337 = vadd.f32 %v336, 1.1283791
      %v338 = vmul.f32 %v318, %v337
      %v339 = vmul.f32 %v327, 3.8918573e-05
      %v340 = vadd.f32 %v339, 0.001143296
      %v341 = vmul.f32 %v327, %v340
      %v342 = vadd.f32 %v341, 0.014752088
      %v343 = vmul.f32 %v327, %v342
      %v344 = vadd.f32 %v343, 0.112945676
      %v345 = vmul.f32 %v327, %v344
      %v346 = vadd.f32 %v345, 0.4994258
      %v347 = vmul.f32 %v327, %v346
      %v348 = vadd.f32 %v347, 1.0
      %v349 = vrcp.pop %v348
      %v350 = vmul.f32 %v348, %v349
      %v351 = vsub.f32 1.0, %v350
      %v352 = vmul.f32 %v349, %v351
      %v353 = vadd.f32 %v349, %v352
      %vm354 = vweird.f32 %v348
      %vm355 = vweird.f32 %v349
      %vm356 = vmor %vm354, %vm355
      %v357 = vsel %vm356, %v349, %v353
      %v358 = vand.u32 2147483647, %v348
      %vm359 = vcmp.eq.f32.partialorder %v358, 8.507059e+37
      %v360 = vand.u32 %v348, 2147483648
      %v361 = vor.u32 1.1754944e-38, %v360
      %v362 = vsel %vm359, %v361, %v357
      %v363 = vmul.f32 %v338, %v362
      %v364 = vmin.f32 %v363, 1.0
      %v365 = vmax.f32 %v364, -1.0
      %v366 = vmul.f32 %v319, %v319
      %v367 = vmin.f32 16.0, %v366
      %v368 = vmul.f32 %v367, 2.1237322e-06
      %v369 = vadd.f32 %v368, 0.00028619796
      %v370 = vmul.f32 %v367, %v369
      %v371 = vadd.f32 %v370, 0.0036580483
      %v372 = vmul.f32 %v367, %v371
      %v373 = vadd.f32 %v372, 0.05243302
      %v374 = vmul.f32 %v367, %v373
      %v375 = vadd.f32 %v374, 0.18741608
      %v376 = vmul.f32 %v367, %v375
      %v377 = vadd.f32 %v376, 1.1283791
      %v378 = vmul.f32 %v319, %v377
      %v379 = vmul.f32 %v367, 3.8918573e-05
      %v380 = vadd.f32 %v379, 0.001143296
      %v381 = vmul.f32 %v367, %v380
      %v382 = vadd.f32 %v381, 0.014752088
      %v383 = vmul.f32 %v367, %v382
      %v384 = vadd.f32 %v383, 0.112945676
      %v385 = vmul.f32 %v367, %v384
      %v386 = vadd.f32 %v385, 0.4994258
      %v387 = vmul.f32 %v367, %v386
      %v388 = vadd.f32 %v387, 1.0
      %v389 = vrcp.pop %v388
      %v390 = vmul.f32 %v388, %v389
      %v391 = vsub.f32 1.0, %v390
      %v392 = vmul.f32 %v389, %v391
      %v393 = vadd.f32 %v389, %v392
      %vm394 = vweird.f32 %v388
      %vm395 = vweird.f32 %v389
      %vm396 = vmor %vm394, %vm395
      %v397 = vsel %vm396, %v389, %v393
      %v398 = vand.u32 2147483647, %v388
      %vm399 = vcmp.eq.f32.partialorder %v398, 8.507059e+37
      %v400 = vand.u32 %v388, 2147483648
      %v401 = vor.u32 1.1754944e-38, %v400
      %v402 = vsel %vm399, %v401, %v397
      %v403 = vmul.f32 %v378, %v402
      %v404 = vmin.f32 %v403, 1.0
      %v405 = vmax.f32 %v404, -1.0
      %v406 = vmul.f32 %v320, %v320
      %v407 = vmin.f32 16.0, %v406
      %v408 = vmul.f32 %v407, 2.1237322e-06
      %v409 = vadd.f32 %v408, 0.00028619796
      %v410 = vmul.f32 %v407, %v409
      %v411 = vadd.f32 %v410, 0.0036580483
      %v412 = vmul.f32 %v407, %v411
      %v413 = vadd.f32 %v412, 0.05243302
      %v414 = vmul.f32 %v407, %v413
      %v415 = vadd.f32 %v414, 0.18741608
      %v416 = vmul.f32 %v407, %v415
      %v417 = vadd.f32 %v416, 1.1283791
      %v418 = vmul.f32 %v320, %v417
      %v419 = vmul.f32 %v407, 3.8918573e-05
      %v420 = vadd.f32 %v419, 0.001143296
      %v421 = vmul.f32 %v407, %v420
      %v422 = vadd.f32 %v421, 0.014752088
      %v423 = vmul.f32 %v407, %v422
      %v424 = vadd.f32 %v423, 0.112945676
      %v425 = vmul.f32 %v407, %v424
      %v426 = vadd.f32 %v425, 0.4994258
      %v427 = vmul.f32 %v407, %v426
      %v428 = vadd.f32 %v427, 1.0
      %v429 = vrcp.pop %v428
      %v430 = vmul.f32 %v428, %v429
      %v431 = vsub.f32 1.0, %v430
      %v432 = vmul.f32 %v429, %v431
      %v433 = vadd.f32 %v429, %v432
      %vm434 = vweird.f32 %v428
      %vm435 = vweird.f32 %v429
      %vm436 = vmor %vm434, %vm435
      %v437 = vsel %vm436, %v429, %v433
      %v438 = vand.u32 2147483647, %v428
      %vm439 = vcmp.eq.f32.partialorder %v438, 8.507059e+37
      %v440 = vand.u32 %v428, 2147483648
      %v441 = vor.u32 1.1754944e-38, %v440
      %v442 = vsel %vm439, %v441, %v437
      %v443 = vmul.f32 %v418, %v442
      %v444 = vmin.f32 %v443, 1.0
      %v445 = vmax.f32 %v444, -1.0
      %v446 = vmul.f32 %v321, %v321
      %v447 = vmin.f32 16.0, %v446
      %v448 = vmul.f32 %v447, 2.1237322e-06
      %v449 = vadd.f32 %v448, 0.00028619796
      %v450 = vmul.f32 %v447, %v449
      %v451 = vadd.f32 %v450, 0.0036580483
      %v452 = vmul.f32 %v447, %v451
      %v453 = vadd.f32 %v452, 0.05243302
      %v454 = vmul.f32 %v447, %v453
      %v455 = vadd.f32 %v454, 0.18741608
      %v456 = vmul.f32 %v447, %v455
      %v457 = vadd.f32 %v456, 1.1283791
      %v458 = vmul.f32 %v321, %v457
      %v459 = vmul.f32 %v447, 3.8918573e-05
      %v460 = vadd.f32 %v459, 0.001143296
      %v461 = vmul.f32 %v447, %v460
      %v462 = vadd.f32 %v461, 0.014752088
      %v463 = vmul.f32 %v447, %v462
      %v464 = vadd.f32 %v463, 0.112945676
      %v465 = vmul.f32 %v447, %v464
      %v466 = vadd.f32 %v465, 0.4994258
      %v467 = vmul.f32 %v447, %v466
      %v468 = vadd.f32 %v467, 1.0
      %v469 = vrcp.pop %v468
      %v470 = vmul.f32 %v468, %v469
      %v471 = vsub.f32 1.0, %v470
      %v472 = vmul.f32 %v469, %v471
      %v473 = vadd.f32 %v469, %v472
      %vm474 = vweird.f32 %v468
      %vm475 = vweird.f32 %v469
      %vm476 = vmor %vm474, %vm475
      %v477 = vsel %vm476, %v469, %v473
      %v478 = vand.u32 2147483647, %v468
      %vm479 = vcmp.eq.f32.partialorder %v478, 8.507059e+37
      %v480 = vand.u32 %v468, 2147483648
      %v481 = vor.u32 1.1754944e-38, %v480
      %v482 = vsel %vm479, %v481, %v477
      %v483 = vmul.f32 %v458, %v482
      %v484 = vmin.f32 %v483, 1.0
      %v485 = vmax.f32 %v484, -1.0
      %v486 = vmul.f32 %v322, %v322
      %v487 = vmin.f32 16.0, %v486
      %v488 = vmul.f32 %v487, 2.1237322e-06
      %v489 = vadd.f32 %v488, 0.00028619796
      %v490 = vmul.f32 %v487, %v489
      %v491 = vadd.f32 %v490, 0.0036580483
      %v492 = vmul.f32 %v487, %v491
      %v493 = vadd.f32 %v492, 0.05243302
      %v494 = vmul.f32 %v487, %v493
      %v495 = vadd.f32 %v494, 0.18741608
      %v496 = vmul.f32 %v487, %v495
      %v497 = vadd.f32 %v496, 1.1283791
      %v498 = vmul.f32 %v322, %v497
      %v499 = vmul.f32 %v487, 3.8918573e-05
      %v500 = vadd.f32 %v499, 0.001143296
      %v501 = vmul.f32 %v487, %v500
      %v502 = vadd.f32 %v501, 0.014752088
      %v503 = vmul.f32 %v487, %v502
      %v504 = vadd.f32 %v503, 0.112945676
      %v505 = vmul.f32 %v487, %v504
      %v506 = vadd.f32 %v505, 0.4994258
      %v507 = vmul.f32 %v487, %v506
      %v508 = vadd.f32 %v507, 1.0
      %v509 = vrcp.pop %v508
      %v510 = vmul.f32 %v508, %v509
      %v511 = vsub.f32 1.0, %v510
      %v512 = vmul.f32 %v509, %v511
      %v513 = vadd.f32 %v509, %v512
      %vm514 = vweird.f32 %v508
      %vm515 = vweird.f32 %v509
      %vm516 = vmor %vm514, %vm515
      %v517 = vsel %vm516, %v509, %v513
      %v518 = vand.u32 2147483647, %v508
      %vm519 = vcmp.eq.f32.partialorder %v518, 8.507059e+37
      %v520 = vand.u32 %v508, 2147483648
      %v521 = vor.u32 1.1754944e-38, %v520
      %v522 = vsel %vm519, %v521, %v517
      %v523 = vmul.f32 %v498, %v522
      %v524 = vmin.f32 %v523, 1.0
      %v525 = vmax.f32 %v524, -1.0
      %v526 = vmul.f32 %v323, %v323
      %v527 = vmin.f32 16.0, %v526
      %v528 = vmul.f32 %v527, 2.1237322e-06
      %v529 = vadd.f32 %v528, 0.00028619796
      %v530 = vmul.f32 %v527, %v529
      %v531 = vadd.f32 %v530, 0.0036580483
      %v532 = vmul.f32 %v527, %v531
      %v533 = vadd.f32 %v532, 0.05243302
      %v534 = vmul.f32 %v527, %v533
      %v535 = vadd.f32 %v534, 0.18741608
      %v536 = vmul.f32 %v527, %v535
      %v537 = vadd.f32 %v536, 1.1283791
      %v538 = vmul.f32 %v323, %v537
      %v539 = vmul.f32 %v527, 3.8918573e-05
      %v540 = vadd.f32 %v539, 0.001143296
      %v541 = vmul.f32 %v527, %v540
      %v542 = vadd.f32 %v541, 0.014752088
      %v543 = vmul.f32 %v527, %v542
      %v544 = vadd.f32 %v543, 0.112945676
      %v545 = vmul.f32 %v527, %v544
      %v546 = vadd.f32 %v545, 0.4994258
      %v547 = vmul.f32 %v527, %v546
      %v548 = vadd.f32 %v547, 1.0
      %v549 = vrcp.pop %v548
      %v550 = vmul.f32 %v548, %v549
      %v551 = vsub.f32 1.0, %v550
      %v552 = vmul.f32 %v549, %v551
      %v553 = vadd.f32 %v549, %v552
      %vm554 = vweird.f32 %v548
      %vm555 = vweird.f32 %v549
      %vm556 = vmor %vm554, %vm555
      %v557 = vsel %vm556, %v549, %v553
      %v558 = vand.u32 2147483647, %v548
      %vm559 = vcmp.eq.f32.partialorder %v558, 8.507059e+37
      %v560 = vand.u32 %v548, 2147483648
      %v561 = vor.u32 1.1754944e-38, %v560
      %v562 = vsel %vm559, %v561, %v557
      %v563 = vmul.f32 %v538, %v562
      %v564 = vmin.f32 %v563, 1.0
      %v565 = vmax.f32 %v564, -1.0
      %v566 = vmul.f32 %v324, %v324
      %v567 = vmin.f32 16.0, %v566
      %v568 = vmul.f32 %v567, 2.1237322e-06
      %v569 = vadd.f32 %v568, 0.00028619796
      %v570 = vmul.f32 %v567, %v569
      %v571 = vadd.f32 %v570, 0.0036580483
      %v572 = vmul.f32 %v567, %v571
      %v573 = vadd.f32 %v572, 0.05243302
      %v574 = vmul.f32 %v567, %v573
      %v575 = vadd.f32 %v574, 0.18741608
      %v576 = vmul.f32 %v567, %v575
      %v577 = vadd.f32 %v576, 1.1283791
      %v578 = vmul.f32 %v324, %v577
      %v579 = vmul.f32 %v567, 3.8918573e-05
      %v580 = vadd.f32 %v579, 0.001143296
      %v581 = vmul.f32 %v567, %v580
      %v582 = vadd.f32 %v581, 0.014752088
      %v583 = vmul.f32 %v567, %v582
      %v584 = vadd.f32 %v583, 0.112945676
      %v585 = vmul.f32 %v567, %v584
      %v586 = vadd.f32 %v585, 0.4994258
      %v587 = vmul.f32 %v567, %v586
      %v588 = vadd.f32 %v587, 1.0
      %v589 = vrcp.pop %v588
      %v590 = vmul.f32 %v588, %v589
      %v591 = vsub.f32 1.0, %v590
      %v592 = vmul.f32 %v589, %v591
      %v593 = vadd.f32 %v589, %v592
      %vm594 = vweird.f32 %v588
      %vm595 = vweird.f32 %v589
      %vm596 = vmor %vm594, %vm595
      %v597 = vsel %vm596, %v589, %v593
      %v598 = vand.u32 2147483647, %v588
      %vm599 = vcmp.eq.f32.partialorder %v598, 8.507059e+37
      %v600 = vand.u32 %v588, 2147483648
      %v601 = vor.u32 1.1754944e-38, %v600
      %v602 = vsel %vm599, %v601, %v597
      %v603 = vmul.f32 %v578, %v602
      %v604 = vmin.f32 %v603, 1.0
      %v605 = vmax.f32 %v604, -1.0
      %v606 = vmul.f32 %v325, %v325
      %v607 = vmin.f32 16.0, %v606
      %v608 = vmul.f32 %v607, 2.1237322e-06
      %v609 = vadd.f32 %v608, 0.00028619796
      %v610 = vmul.f32 %v607, %v609
      %v611 = vadd.f32 %v610, 0.0036580483
      %v612 = vmul.f32 %v607, %v611
      %v613 = vadd.f32 %v612, 0.05243302
      %v614 = vmul.f32 %v607, %v613
      %v615 = vadd.f32 %v614, 0.18741608
      %v616 = vmul.f32 %v607, %v615
      %v617 = vadd.f32 %v616, 1.1283791
      %v618 = vmul.f32 %v325, %v617
      %v619 = vmul.f32 %v607, 3.8918573e-05
      %v620 = vadd.f32 %v619, 0.001143296
      %v621 = vmul.f32 %v607, %v620
      %v622 = vadd.f32 %v621, 0.014752088
      %v623 = vmul.f32 %v607, %v622
      %v624 = vadd.f32 %v623, 0.112945676
      %v625 = vmul.f32 %v607, %v624
      %v626 = vadd.f32 %v625, 0.4994258
      %v627 = vmul.f32 %v607, %v626
      %v628 = vadd.f32 %v627, 1.0
      %v629 = vrcp.pop %v628
      %v630 = vmul.f32 %v628, %v629
      %v631 = vsub.f32 1.0, %v630
      %v632 = vmul.f32 %v629, %v631
      %v633 = vadd.f32 %v629, %v632
      %vm634 = vweird.f32 %v628
      %vm635 = vweird.f32 %v629
      %vm636 = vmor %vm634, %vm635
      %v637 = vsel %vm636, %v629, %v633
      %v638 = vand.u32 2147483647, %v628
      %vm639 = vcmp.eq.f32.partialorder %v638, 8.507059e+37
      %v640 = vand.u32 %v628, 2147483648
      %v641 = vor.u32 1.1754944e-38, %v640
      %v642 = vsel %vm639, %v641, %v637
      %v643 = vmul.f32 %v618, %v642
      %v644 = vmin.f32 %v643, 1.0
      %v645 = vmax.f32 %v644, -1.0
      %v646 = vadd.f32 %v365, 1.0
      %v647 = vadd.f32 %v405, 1.0
      %v648 = vadd.f32 %v445, 1.0
      %v649 = vadd.f32 %v485, 1.0
      %v650 = vadd.f32 %v525, 1.0
      %v651 = vadd.f32 %v565, 1.0
      %v652 = vadd.f32 %v605, 1.0
      %v653 = vadd.f32 %v645, 1.0
      %v654 = vmul.f32 %v310, %v646
      %v655 = vmul.f32 %v311, %v647
      %v656 = vmul.f32 %v312, %v648
      %v657 = vmul.f32 %v313, %v649
      %v658 = vmul.f32 %v314, %v650
      %v659 = vmul.f32 %v315, %v651
      %v660 = vmul.f32 %v316, %v652
      %v661 = vmul.f32 %v317, %v653
      %v662 = vld [vmem:[%s3] sm:$0xff]
      %v663 = vld [vmem:[%s3 + $0x8] sm:$0xff]
      %v664 = vld [vmem:[%s3 + $0x10] sm:$0xff]
      %v665 = vld [vmem:[%s3 + $0x18] sm:$0xff]
      %v666 = vld [vmem:[%s3 + $0x20] sm:$0xff]
      %v667 = vld [vmem:[%s3 + $0x28] sm:$0xff]
      %v668 = vld [vmem:[%s3 + $0x30] sm:$0xff]
      %v669 = vld [vmem:[%s3 + $0x38] sm:$0xff]
      %v670 = vld [vmem:[%s3 + $0x40] sm:$0xff]
      %v671 = vld [vmem:[%s3 + $0x48] sm:$0xff]
      %v672 = vld [vmem:[%s3 + $0x50] sm:$0xff]
      %v673 = vld [vmem:[%s3 + $0x58] sm:$0xff]
      %v674 = vld [vmem:[%s3 + $0x60] sm:$0xff]
      %v675 = vld [vmem:[%s3 + $0x68] sm:$0xff]
      %v676 = vld [vmem:[%s3 + $0x70] sm:$0xff]
      %v677 = vld [vmem:[%s3 + $0x78] sm:$0xff]
      %v678 = vld [vmem:[%s4] sm:$0x1]
      %v680 = vperm.slane %v678, 0
      %682 = vmatpush.msra.mxu0 %v677
      %683 = vmatpush.msra.mxu0 %v676
      %684 = vmatpush.msra.mxu0 %v675
      %685 = vmatpush.msra.mxu0 %v674
      %686 = vmatpush.msra.mxu0 %v673
      %687 = vmatpush.msra.mxu0 %v672
      %688 = vmatpush.msra.mxu0 %v671
      %689 = vmatpush.msra.mxu0 %v670
      %690 = vmatpush.msra.mxu0 %v669
      %691 = vmatpush.msra.mxu0 %v668
      %692 = vmatpush.msra.mxu0 %v667
      %693 = vmatpush.msra.mxu0 %v666
      %694 = vmatpush.msra.mxu0 %v665
      %695 = vmatpush.msra.mxu0 %v664
      %696 = vmatpush.msra.mxu0 %v663
      %697 = vmatpush.msra.mxu0 %v662
      %698 = vmatmul.f32.gmra.mxu0 %v654
      %v699 = vpop.f32.mrf.mxu0
      %v700 = vadd.f32 %v680, %v699
      %701 = vmatmul.f32.gmra.mxu0 %v655
      %v702 = vpop.f32.mrf.mxu0
      %v703 = vadd.f32 %v680, %v702
      %704 = vmatmul.f32.gmra.mxu0 %v656
      %v705 = vpop.f32.mrf.mxu0
      %v706 = vadd.f32 %v680, %v705
      %707 = vmatmul.f32.gmra.mxu0 %v657
      %v708 = vpop.f32.mrf.mxu0
      %v709 = vadd.f32 %v680, %v708
      %710 = vmatmul.f32.gmra.mxu0 %v658
      %v711 = vpop.f32.mrf.mxu0
      %v712 = vadd.f32 %v680, %v711
      %713 = vmatmul.f32.gmra.mxu0 %v659
      %v714 = vpop.f32.mrf.mxu0
      %v715 = vadd.f32 %v680, %v714
      %716 = vmatmul.f32.gmra.mxu0 %v660
      %v717 = vpop.f32.mrf.mxu0
      %v718 = vadd.f32 %v680, %v717
      %719 = vmatmul.f32.gmra.mxu0 %v661
      %v720 = vpop.f32.mrf.mxu0
      %v721 = vadd.f32 %v680, %v720
      %722 = vdwg.mxu0
      %723 = vst.msk [vmem:[%s226] sm:$0xff] %vm244, %v700
      %724 = vst.msk [vmem:[%s226 + $0x8] sm:$0xff] %vm244, %v703
      %725 = vst.msk [vmem:[%s226 + $0x10] sm:$0xff] %vm244, %v706
      %726 = vst.msk [vmem:[%s226 + $0x18] sm:$0xff] %vm244, %v709
      %727 = vst.msk [vmem:[%s226 + $0x20] sm:$0xff] %vm244, %v712
      %728 = vst.msk [vmem:[%s226 + $0x28] sm:$0xff] %vm244, %v715
      %729 = vst.msk [vmem:[%s226 + $0x30] sm:$0xff] %vm244, %v718
      %730 = vst.msk [vmem:[%s226 + $0x38] sm:$0xff] %vm244, %v721
      %s731 = smul.u32 8, %s16
      %p732 = scmp.lt.s32.totalorder %s731, 31
      %s733 = scalar_select %p732, %s731, 31
      %s734 = smul.addr %s733, 8
      %s735 = scalar_lea.vmem %s5, %s734
      // Predicated region
      $region41: #{tpu_custom_call.1} parent=39 // pred_check
        %p736 = pneg %p144
      $region42: #{tpu_custom_call.1} parent=39 // pred_check_branch
        %738 = sbr.rel (%p736) target = $region44
      $region43: #{tpu_custom_call.1} parent=39 // pred_region
        %s739 = smul.u32 8, %s16
      $region44: #{tpu_custom_call.1} parent=39 // pred_fallthru
        _
    $region40: #{tpu_custom_call.1} parent=5 // pred_fallthru
      _
    %p740 = scmp.le.s32.totalorder 2, %s11
    // Predicated region
    $region45: #{tpu_custom_call.1} parent=5 // pred_check
      %p741 = pneg %p740
    $region46: #{tpu_custom_call.1} parent=5 // pred_check_branch
      %743 = sbr.rel (%p741) target = $region48
    $region47: #{tpu_custom_call.1} parent=5 // pred_region
      %s744 = ssub.s32 %s11, 2
      // Predicated region
      $region49: #{tpu_custom_call.1} parent=47 // pred_check
        %p745 = pneg %p150
      $region50: #{tpu_custom_call.1} parent=47 // pred_check_branch
        %747 = sbr.rel (%p745) target = $region52
      $region51: #{tpu_custom_call.1} parent=47 // pred_region
        %s748 = smul.u32 8, %s17
        %p749 = scmp.lt.s32.totalorder %s748, 31
        %s750 = scalar_select %p749, %s748, 31
        %s751 = smul.addr %s750, 8
        %s752 = scalar_lea.vmem %s5, %s751
      $region52: #{tpu_custom_call.1} parent=47 // pred_fallthru
        _
    $region48: #{tpu_custom_call.1} parent=5 // pred_fallthru
      _
  $region6: #{tpu_custom_call.1} parent=0 // loop_footer
    %s15 = sadd.s32 1, %s11
  $region7: #{tpu_custom_call.1} parent=0 // loop_footer_branch
    %10 = sbr.rel target = $region3
  $region8: #{tpu_custom_call.1} parent=0 // loop_exit
    _

</llo_original>
